<compile_context>
chip_gen: v7x
topology: tpu7x:2x2x1
jax: 0.10.0
libtpu: 0.0.40
codegen_flags: <defaults>
</compile_context>

<pallas_src>
import functools

import jax
import jax.numpy as jnp
from jax.experimental import pallas as pl
from jax.experimental.pallas import tpu as pltpu


_VMEM_LIMIT_BYTES = 40 * 1024 * 1024   # headroom for 2x4.7MB conv4 weights


# -------------------------------------------------------------------------
# conv3x3 (+ bias / ReLU / optional fused 2x2 maxpool) kernel
# -------------------------------------------------------------------------

def _conv3x3_kernel(*refs, TR, W, pool, pointwise):
    # pointwise:  x_ref(1,TR,W,K)           w_ref(1,K,TC)      -> single matmul
    # otherwise:  x_ref(1,TR,W,Cin) + halos w_ref(T,K,TC), T in {3, 9}
    if pointwise:
        x_ref, w_ref, b_ref, o_ref = refs
    else:
        x_ref, xt_ref, xb_ref, w_ref, b_ref, o_ref = refs

    Cin = x_ref.shape[-1]
    TC = w_ref.shape[-1]
    T = w_ref.shape[0]

    x_mid = x_ref[0]                                   # (TR, W, Cin)

    if pointwise:
        # conv1_1: input was im2col'ed (K=27) in the wrapper -> one MXU pass.
        acc = jnp.dot(x_mid.reshape(TR * W, Cin), w_ref[0],
                      preferred_element_type=jnp.float32)
    else:
        ri = pl.program_id(2)
        n_r = pl.num_programs(2)
        top = xt_ref[0]                                # row r*TR-1 (clamped)
        bot = xb_ref[0]                                # row r*TR+TR (clamped)
        # Zero halo rows at the image border (zero padding after norm, as in
        # PyTorch's padded conv on the normalised input).
        top = jnp.where(ri == 0, jnp.zeros_like(top), top)
        bot = jnp.where(ri == n_r - 1, jnp.zeros_like(bot), bot)
        xh = jnp.concatenate([top, x_mid, bot], axis=0)        # (TR+2, W, Cin)

        # Column-shifted views (zero at image left/right borders).
        # TODO(synk): pltpu.roll(axis=1)+mask would move these copies to the
        # XLU, but sublane rolls on W<8 tiles are not guaranteed to lower.
        zcol = jnp.zeros((TR + 2, 1, Cin), xh.dtype)
        x_l = jnp.concatenate([zcol, xh[:, :W - 1, :]], axis=1)  # column x-1
        x_r = jnp.concatenate([xh[:, 1:, :], zcol], axis=1)      # column x+1

        acc = None
        if T == 3:
            # kx taps merged along channels: 3 matmuls of depth 3*Cin.
            xcat = jnp.concatenate([x_l, xh, x_r], axis=-1)      # (TR+2,W,3Cin)
            for ky in range(3):
                # TODO(synk): a 3-D dot_general (contract channels) would
                # avoid this flatten copy when W % 8 != 0.
                p = xcat[ky:ky + TR].reshape(TR * W, 3 * Cin)
                d = jnp.dot(p, w_ref[ky], preferred_element_type=jnp.float32)
                acc = d if acc is None else acc + d
        else:
            # Cin=64 layers: 9 taps, local f32 accumulation (no scratch RMW).
            shifted = (x_l, xh, x_r)
            for ky in range(3):
                for kx in range(3):
                    p = shifted[kx][ky:ky + TR].reshape(TR * W, Cin)
                    d = jnp.dot(p, w_ref[ky * 3 + kx],
                                preferred_element_type=jnp.float32)
                    acc = d if acc is None else acc + d

    y = jnp.maximum(acc + b_ref[...], 0.0)                       # bias + ReLU
    y = y.reshape(TR, W, TC)
    if pool:                                                     # fused maxpool
        y = jnp.max(y.reshape(TR, W // 2, 2, TC), axis=2)
        y = jnp.max(y.reshape(TR // 2, 2, W // 2, TC), axis=1)
    o_ref[0] = y.astype(o_ref.dtype)


def _pick_tile_rows(H):
    # Larger row tiles for the bandwidth-bound high-resolution layers.
    cands = (16, 8, 4, 2) if H >= 112 else (8, 4, 2)
    for cand in cands:
        if H % cand == 0:
            return cand
    return H  # TODO(synk): odd spatial sizes (PyTorch floor-pooling) unsupported.


def conv3x3_relu(x, w, b, *, pool=False, pointwise=False):
    """x: (B,H,W,Cin) bf16, w: (3,3,Cin0,Cout) bf16, b: (Cout,) f32."""
    B, H, W, Cin_x = x.shape
    Cout = w.shape[-1]

    if pointwise:
        w_m = w.reshape(1, -1, Cout)                 # (1, 9*Cin0, Cout)
        assert w_m.shape[1] == Cin_x
    elif Cin_x % 128 == 0:
        w_m = w.reshape(3, 3 * Cin_x, Cout)          # kx taps merged into K
    else:
        w_m = w.reshape(9, Cin_x, Cout)              # per-tap weights
    T, K = w_m.shape[0], w_m.shape[1]

    TR = _pick_tile_rows(H)
    TC = min(Cout, 512)
    n_r, n_co = H // TR, Cout // TC
    out_H, out_W = (H // 2, W // 2) if pool else (H, W)
    out_TR = TR // 2 if pool else TR

    in_specs = [pl.BlockSpec((1, TR, W, Cin_x), lambda bi, ci, ri: (bi, ri, 0, 0))]
    args = [x]
    if not pointwise:
        in_specs += [
            pl.BlockSpec((1, 1, W, Cin_x),
                         lambda bi, ci, ri: (bi, jnp.maximum(ri * TR - 1, 0), 0, 0)),
            pl.BlockSpec((1, 1, W, Cin_x),
                         lambda bi, ci, ri: (bi, jnp.minimum(ri * TR + TR, H - 1), 0, 0)),
        ]
        args += [x, x]
    in_specs += [
        pl.BlockSpec((T, K, TC), lambda bi, ci, ri: (0, 0, ci)),
        pl.BlockSpec((1, TC), lambda bi, ci, ri: (0, ci)),
    ]
    args += [w_m, b.reshape(1, Cout)]

    kernel = functools.partial(_conv3x3_kernel, TR=TR, W=W, pool=pool,
                               pointwise=pointwise)
    return pl.pallas_call(
        kernel,
        out_shape=jax.ShapeDtypeStruct((B, out_H, out_W, Cout), jnp.bfloat16),
        grid=(B, n_co, n_r),                 # rows innermost: weights stay resident
        in_specs=in_specs,
        out_specs=pl.BlockSpec((1, out_TR, out_W, TC),
                               lambda bi, ci, ri: (bi, ri, 0, ci)),
        compiler_params=pltpu.CompilerParams(
            dimension_semantics=("parallel", "parallel", "parallel"),
            vmem_limit_bytes=_VMEM_LIMIT_BYTES),
    )(*args)


# -------------------------------------------------------------------------
# MSE(reduction='sum') as a tiled grid reduction with per-lane partials
# -------------------------------------------------------------------------

def _mse_sum_kernel(a_ref, b_ref, o_ref, acc_ref):
    i = pl.program_id(0)

    @pl.when(i == 0)
    def _():
        acc_ref[...] = jnp.zeros_like(acc_ref)

    d = a_ref[...].astype(jnp.float32) - b_ref[...].astype(jnp.float32)
    sq = d * d
    C = sq.shape[-1]
    # Per-(sublane, lane) partial accumulation; cheap VPU adds per step.
    acc_ref[...] += jnp.sum(sq.reshape(-1, 8, C), axis=0)

    @pl.when(i == pl.num_programs(0) - 1)
    def _():
        o_ref[...] = jnp.sum(acc_ref[...]).reshape(1, 1)   # single final reduce


def mse_sum(a, b):
    C = a.shape[-1]
    a2 = a.reshape(-1, C)
    b2 = b.reshape(-1, C)
    M = a2.shape[0]
    TM = 512 if M >= 512 else ((M + 7) // 8) * 8
    Mp = pl.cdiv(M, TM) * TM
    if Mp != M:                       # zero tail rows contribute 0 to the sum
        a2 = jnp.pad(a2, ((0, Mp - M), (0, 0)))
        b2 = jnp.pad(b2, ((0, Mp - M), (0, 0)))
    out = pl.pallas_call(
        _mse_sum_kernel,
        out_shape=jax.ShapeDtypeStruct((1, 1), jnp.float32),
        grid=(Mp // TM,),
        in_specs=[pl.BlockSpec((TM, C), lambda i: (i, 0)),
                  pl.BlockSpec((TM, C), lambda i: (i, 0))],
        out_specs=pl.BlockSpec((1, 1), lambda i: (0, 0)),
        scratch_shapes=[pltpu.VMEM((8, C), jnp.float32)],
        compiler_params=pltpu.CompilerParams(dimension_semantics=("arbitrary",)),
    )(a2, b2)
    return out[0, 0]


# -------------------------------------------------------------------------
# VGG19 features[:-10] configuration & deterministic synthetic parameters
# -------------------------------------------------------------------------

# conv1_1, conv1_2, pool1, conv2_1, conv2_2, pool2,
# conv3_1..conv3_4, pool3, conv4_1..conv4_4   (pool4 dropped by [:-10])
_VGG_SLICE_CFG = [64, 64, "P", 128, 128, "P",
                  256, 256, 256, 256, "P",
                  512, 512, 512, 512]


def init_params(key):
    # TODO(synk): torchvision pretrained VGG19 weights replaced with
    # deterministic He-style random init (no checkpoint loading allowed).
    params = []
    cin = 3
    for item in _VGG_SLICE_CFG:
        if item == "P":
            w, b, _ = params[-1]
            params[-1] = (w, b, True)          # fuse this pool into prev conv
            continue
        cout = int(item)
        key, kw, kb = jax.random.split(key, 3)
        scale = (2.0 / (9.0 * cin)) ** 0.5
        w = (scale * jax.random.normal(kw, (3, 3, cin, cout), jnp.float32)
             ).astype(jnp.bfloat16)
        b = 0.01 * jax.random.normal(kb, (cout,), jnp.float32)
        params.append((w, b, False))
        cin = cout
    return params


def _im2col_3x3(x):
    """(N,H,W,C) -> (N,H,W,9C) with zero padding; tap order (ky, kx, c)."""
    N, H, W, C = x.shape
    xp = jnp.pad(x, ((0, 0), (1, 1), (1, 1), (0, 0)))
    cols = [xp[:, ky:ky + H, kx:kx + W, :] for ky in range(3) for kx in range(3)]
    return jnp.concatenate(cols, axis=-1)


def vgg_loss_sep_conv(output, target, params, mean, istd):
    """Forward pass of VGGLossSepConv.

    output, target: (B, 3, H, W) float32, NCHW (PyTorch convention).
    Returns scalar float32 loss = sum((feat(output) - feat(target))^2).
    """
    B = output.shape[0]
    x = jnp.concatenate([output, target], axis=0)             # (2B, 3, H, W)
    x = jnp.transpose(x, (0, 2, 3, 1))                        # NCHW -> NHWC
    x = ((x - mean) * istd).astype(jnp.bfloat16)              # norm fused in wrapper
    x = _im2col_3x3(x)                                        # conv1_1 -> K=27 matmul
    for li, (w, b, pool) in enumerate(params):
        x = conv3x3_relu(x, w, b, pool=pool, pointwise=(li == 0))
    return mse_sum(x[:B], x[B:])


# -------------------------------------------------------------------------

if __name__ == "__main__":
    key = jax.random.PRNGKey(0)
    kp, ko, kt = jax.random.split(key, 3)

    params = init_params(kp)
    mean = jnp.array([0.485, 0.456, 0.406], jnp.float32)
    istd = 1.0 / jnp.array([0.229, 0.224, 0.225], jnp.float32)

    B, C, H, W = 2, 3, 16, 16
    output = jax.random.uniform(ko, (B, C, H, W), jnp.float32)
    target = jax.random.uniform(kt, (B, C, H, W), jnp.float32)

    loss = vgg_loss_sep_conv(output, target, params, mean, istd)
    jax.block_until_ready(loss)
    assert loss.shape == () and jnp.isfinite(loss)
    print("KERNEL_OK")
</pallas_src>

<mosaic_0001>
module attributes {stable_mosaic.version = 11 : i64} {
  func.func @_conv3x3_kernel(%arg0: i32, %arg1: i32, %arg2: i32, %arg3: memref<1x8x16x27xbf16, #tpu.memory_space<vmem>>, %arg4: memref<1x27x64xbf16, #tpu.memory_space<vmem>>, %arg5: memref<1x64xf32, #tpu.memory_space<vmem>>, %arg6: memref<1x8x16x64xbf16, #tpu.memory_space<vmem>>) attributes {dimension_semantics = [#tpu.dimension_semantics<parallel>, #tpu.dimension_semantics<parallel>, #tpu.dimension_semantics<parallel>], iteration_bounds = array<i64: 4, 1, 2>, scalar_prefetch = 0 : i64, scratch_operands = 0 : i64, tpu.core_type = #tpu.core_type<tc>, window_params = [{transform_indices = @transform_0, window_bounds = array<i64: 1, 8, 16, 27>}, {transform_indices = @transform_1, window_bounds = array<i64: 1, 27, 64>}, {transform_indices = @transform_2, window_bounds = array<i64: 1, 64>}, {transform_indices = @transform_3, window_bounds = array<i64: 1, 8, 16, 64>}]} {
    %c0 = arith.constant 0 : index
    %c0_0 = arith.constant 0 : index
    %c0_1 = arith.constant 0 : index
    %c0_2 = arith.constant 0 : index
    %0 = vector.load %arg3[%c0, %c0_0, %c0_1, %c0_2] : memref<1x8x16x27xbf16, #tpu.memory_space<vmem>>, vector<1x8x16x27xbf16>
    %1 = vector.shape_cast %0 : vector<1x8x16x27xbf16> to vector<8x16x27xbf16>
    %2 = vector.shape_cast %1 : vector<8x16x27xbf16> to vector<128x27xbf16>
    %c0_3 = arith.constant 0 : index
    %c0_4 = arith.constant 0 : index
    %c0_5 = arith.constant 0 : index
    %3 = vector.load %arg4[%c0_3, %c0_4, %c0_5] : memref<1x27x64xbf16, #tpu.memory_space<vmem>>, vector<1x27x64xbf16>
    %4 = vector.shape_cast %3 : vector<1x27x64xbf16> to vector<27x64xbf16>
    %cst = arith.constant dense<0.000000e+00> : vector<128x64xf32>
    %5 = tpu.matmul %2, %4, %cst {dimension_numbers = #tpu.dot_dimension_numbers<[1], [0], [0], [1], [0, 0, 1, 1], [], []>} : vector<128x27xbf16>, vector<27x64xbf16>, vector<128x64xf32> -> vector<128x64xf32>
    %c0_6 = arith.constant 0 : index
    %c0_7 = arith.constant 0 : index
    %6 = vector.load %arg5[%c0_6, %c0_7] : memref<1x64xf32, #tpu.memory_space<vmem>>, vector<1x64xf32>
    %7 = vector.broadcast %6 : vector<1x64xf32> to vector<128x64xf32>
    %8 = arith.addf %5, %7 : vector<128x64xf32>
    %cst_8 = arith.constant 0.000000e+00 : f32
    %9 = vector.broadcast %cst_8 : f32 to vector<128x64xf32>
    %10 = arith.maximumf %8, %9 : vector<128x64xf32>
    %11 = vector.shape_cast %10 : vector<128x64xf32> to vector<8x16x64xf32>
    %12 = arith.truncf %11 : vector<8x16x64xf32> to vector<8x16x64xbf16>
    %c0_9 = arith.constant 0 : index
    %c0_10 = arith.constant 0 : index
    %c0_11 = arith.constant 0 : index
    %c0_12 = arith.constant 0 : index
    %13 = vector.load %arg6[%c0_9, %c0_10, %c0_11, %c0_12] : memref<1x8x16x64xbf16, #tpu.memory_space<vmem>>, vector<1x8x16x64xbf16>
    %14 = vector.shape_cast %13 : vector<1x8x16x64xbf16> to vector<8x16x64xbf16>
    %15 = vector.shape_cast %12 : vector<8x16x64xbf16> to vector<1x8x16x64xbf16>
    tpu.vector_store %arg6[%c0_9, %c0_10, %c0_11, %c0_12], %15 {strides = array<i32>} : memref<1x8x16x64xbf16, #tpu.memory_space<vmem>>, vector<1x8x16x64xbf16>,
    return
  }
  func.func @transform_0(%arg0: i32, %arg1: i32, %arg2: i32) -> (i32, i32, i32, i32) {
    %c0_i32 = arith.constant 0 : i32
    %c0_i32_0 = arith.constant 0 : i32
    %c0_i32_1 = arith.constant 0 : i32
    return %arg0, %arg2, %c0_i32, %c0_i32_0 : i32, i32, i32, i32
  }
  func.func @transform_1(%arg0: i32, %arg1: i32, %arg2: i32) -> (i32, i32, i32) {
    %c0_i32 = arith.constant 0 : i32
    %c0_i32_0 = arith.constant 0 : i32
    %c0_i32_1 = arith.constant 0 : i32
    return %c0_i32, %c0_i32_0, %arg1 : i32, i32, i32
  }
  func.func @transform_2(%arg0: i32, %arg1: i32, %arg2: i32) -> (i32, i32) {
    %c0_i32 = arith.constant 0 : i32
    %c0_i32_0 = arith.constant 0 : i32
    return %c0_i32, %arg1 : i32, i32
  }
  func.func @transform_3(%arg0: i32, %arg1: i32, %arg2: i32) -> (i32, i32, i32, i32) {
    %c0_i32 = arith.constant 0 : i32
    %c0_i32_0 = arith.constant 0 : i32
    return %arg0, %arg2, %c0_i32, %arg1 : i32, i32, i32, i32
  }
}

</mosaic_0001>

<llo_original>
// kernel: tpu_custom_call.1
$region0: #{tpu_custom_call.1}
  #allocation0 [shape = 'u32[]', space=smem, size = 0x4, offset = 0x4, fixed_abs, tag = 'smem constant byte address 0x4 - core index']
  #allocation1 [shape = 'u32[144,128]{1,0:T(1,128)}', space=vmem, size = 0x12000, scoped, tag = 'internal scratch']
  %s0 = inlined_call_operand.hbm [shape: bf16[4,16,16,27], index: 0, kind: input, shape index: {}]
  %s1 = inlined_call_operand.hbm [shape: bf16[1,27,64], index: 1, kind: input, shape index: {}]
  %s2 = inlined_call_operand.vmem [shape: f32[1,64], index: 2, kind: input, shape index: {}]
  %s3 = inlined_call_operand.hbm [shape: bf16[4,16,16,64], index: 3, kind: output, shape index: {}]
  %s4 = sld [smem:[#allocation0]]
  $region53: #{tpu_custom_call.1} parent=0
    _
  %s6 = ssub.s32 1, %s4
  %s7 = scalar_select 0, %s6, %s4
  $region1: #{tpu_custom_call.1} parent=0
    #allocation2 [shape = 'u8[65536]{0}', space=vmem, size = 0x10000, scoped, tag = 'input window, operand 0']
    #allocation3 [shape = 's32[2]{0}', space=sflag, size = 0x8, scoped, tag = 'scoped memory for tpu_custom_call.1']
    #allocation4 [shape = 's32[2]{0}', space=sflag, size = 0x8, scoped, tag = 'scoped memory for tpu_custom_call.1']
    #allocation5 [shape = 'u8[8192]{0}', space=vmem, size = 0x2000, scoped, tag = 'input window, operand 1, single buffered']
    #allocation6 [shape = 's32[1]{0}', space=sflag, size = 0x4, scoped, tag = 'scoped memory for tpu_custom_call.1']
    #allocation7 [shape = 'u8[65536]{0}', space=vmem, size = 0x10000, scoped, tag = 'output window, operand 0']
    %8 = vsyncpa [#allocation3], 0
    %s9 = scalar_lea.sflag [#allocation3], 1
    %10 = vsyncpa %s9, 0
    %11 = vsyncpa [#allocation6], 0
    %12 = vsyncpa [#allocation4], 0
    %s13 = scalar_lea.sflag [#allocation4], 1
    %14 = vsyncpa %s13, 0
    loop: start=0, step=1, limit=10
    $region2: #{tpu_custom_call.1} parent=1 // loop_pre_header
      _
    $region3: #{tpu_custom_call.1} parent=1 // loop_header
      %s16 = sphi 0, %s20
      %p17 = scmp.ge.s32.totalorder %s16, 10
      %s23 = sphi 0, %s42
      %s24 = sphi 0, %s38
      %s25 = sphi 0, %s34
      %s26 = sphi 0, %s23
      %s27 = sphi 0, %s24
      %s28 = sphi 0, %s25
      %s29 = sphi 0, %s26
      %s30 = sphi 0, %s27
      %s31 = sphi 0, %s28
      %s47 = sphi 0, %s49
      %s50 = sphi 0, %s47
      %s51 = sphi 0, %s50
      %s67 = sphi 0, %s51
      %s73 = sphi 0, %s75
      %s76 = sphi 0, %s73
      %s77 = sphi 0, %s76
      %s93 = sphi 0, %s77
      %s99 = sphi 0, %s101
      %s102 = sphi 0, %s99
      %s103 = sphi 0, %s102
      %s119 = sphi 0, %s103
      %s129 = sphi 0, %s131
      %s132 = sphi 0, %s129
      %s133 = sphi 0, %s132
      %s149 = sphi 0, %s133
    $region4: #{tpu_custom_call.1} parent=1 // loop_header_branch
      %19 = sbr.rel (%p17) target = $region8
    $region5: #{tpu_custom_call.1} parent=1 // loop_body
      %s21 = ssub.s32 %s16, 1
      %s22 = ssub.s32 %s16, 2
      %s32 = sadd.s32 1, %s25
      %p33 = scmp.ge.s32.totalorder %s32, 2
      %s34 = scalar_select %p33, 0, %s32
      %s35 = sadd.s32 1, %s24
      %s36 = scalar_select %p33, %s35, %s24
      %p37 = scmp.ge.s32.totalorder %s36, 1
      %s38 = scalar_select %p37, 0, %s36
      %s39 = sadd.s32 1, %s23
      %s40 = scalar_select %p37, %s39, %s23
      %p41 = scmp.ge.s32.totalorder %s40, 4
      %s42 = scalar_select %p41, 0, %s40
      %s43 = ssub.s32 %s23, %s42
      %s44 = ssub.s32 %s25, %s34
      %s45 = sor.u32 %s43, %s44
      %p46 = scmp.eq.s32.totalorder %s45, 0
      %s48 = sadd.s32 %s47, 1
      %s49 = scalar_select %p46, %s47, %s48
      %p52 = pneg %p46
      %p53 = scmp.eq.s32.totalorder %s16, 7
      %p54 = por %p52, %p53
      %p55 = scmp.ne.s32.totalorder %s47, %s50
      %p56 = scmp.eq.s32.totalorder %s16, 0
      %p57 = por %p55, %p56
      %p58 = scmp.ne.s32.totalorder %s47, %s50
      %p59 = scmp.eq.s32.totalorder %s21, 7
      %p60 = por %p58, %p59
      %p61 = scmp.ne.s32.totalorder %s50, %s51
      %p62 = scmp.eq.s32.totalorder %s21, 0
      %p63 = por %p61, %p62
      %p64 = scmp.ne.s32.totalorder %s50, %s51
      %p65 = scmp.eq.s32.totalorder %s22, 7
      %p66 = por %p64, %p65
      %p68 = scmp.ne.s32.totalorder %s51, %s67
      %p69 = scmp.eq.s32.totalorder %s22, 0
      %p70 = por %p68, %p69
      %s71 = ssub.s32 %s24, %s38
      %p72 = scmp.eq.s32.totalorder %s71, 0
      %s74 = sadd.s32 %s73, 1
      %s75 = scalar_select %p72, %s73, %s74
      %p78 = pneg %p72
      %p79 = scmp.eq.s32.totalorder %s16, 7
      %p80 = por %p78, %p79
      %p81 = scmp.ne.s32.totalorder %s73, %s76
      %p82 = scmp.eq.s32.totalorder %s16, 0
      %p83 = por %p81, %p82
      %p84 = scmp.ne.s32.totalorder %s73, %s76
      %p85 = scmp.eq.s32.totalorder %s21, 7
      %p86 = por %p84, %p85
      %p87 = scmp.ne.s32.totalorder %s76, %s77
      %p88 = scmp.eq.s32.totalorder %s21, 0
      %p89 = por %p87, %p88
      %p90 = scmp.ne.s32.totalorder %s76, %s77
      %p91 = scmp.eq.s32.totalorder %s22, 7
      %p92 = por %p90, %p91
      %p94 = scmp.ne.s32.totalorder %s77, %s93
      %p95 = scmp.eq.s32.totalorder %s22, 0
      %p96 = por %p94, %p95
      %s97 = ssub.s32 %s24, %s38
      %p98 = scmp.eq.s32.totalorder %s97, 0
      %s100 = sadd.s32 %s99, 1
      %s101 = scalar_select %p98, %s99, %s100
      %p104 = pneg %p98
      %p105 = scmp.eq.s32.totalorder %s16, 7
      %p106 = por %p104, %p105
      %p107 = scmp.ne.s32.totalorder %s99, %s102
      %p108 = scmp.eq.s32.totalorder %s16, 0
      %p109 = por %p107, %p108
      %p110 = scmp.ne.s32.totalorder %s99, %s102
      %p111 = scmp.eq.s32.totalorder %s21, 7
      %p112 = por %p110, %p111
      %p113 = scmp.ne.s32.totalorder %s102, %s103
      %p114 = scmp.eq.s32.totalorder %s21, 0
      %p115 = por %p113, %p114
      %p116 = scmp.ne.s32.totalorder %s102, %s103
      %p117 = scmp.eq.s32.totalorder %s22, 7
      %p118 = por %p116, %p117
      %p120 = scmp.ne.s32.totalorder %s103, %s119
      %p121 = scmp.eq.s32.totalorder %s22, 0
      %p122 = por %p120, %p121
      %s123 = ssub.s32 %s23, %s42
      %s124 = ssub.s32 %s25, %s34
      %s125 = sor.u32 %s123, %s124
      %s126 = ssub.s32 %s24, %s38
      %s127 = sor.u32 %s125, %s126
      %p128 = scmp.eq.s32.totalorder %s127, 0
      %s130 = sadd.s32 %s129, 1
      %s131 = scalar_select %p128, %s129, %s130
      %p134 = pneg %p128
      %p135 = scmp.eq.s32.totalorder %s16, 7
      %p136 = por %p134, %p135
      %p137 = scmp.ne.s32.totalorder %s129, %s132
      %p138 = scmp.eq.s32.totalorder %s16, 0
      %p139 = por %p137, %p138
      %p140 = scmp.ne.s32.totalorder %s129, %s132
      %p141 = scmp.eq.s32.totalorder %s21, 7
      %p142 = por %p140, %p141
      %p143 = scmp.ne.s32.totalorder %s132, %s133
      %p144 = scmp.eq.s32.totalorder %s21, 0
      %p145 = por %p143, %p144
      %p146 = scmp.ne.s32.totalorder %s132, %s133
      %p147 = scmp.eq.s32.totalorder %s22, 7
      %p148 = por %p146, %p147
      %p150 = scmp.ne.s32.totalorder %s133, %s149
      %p151 = scmp.eq.s32.totalorder %s22, 0
      %p152 = por %p150, %p151
      %p153 = scmp.le.s32.totalorder 1, %s16
      %p154 = scmp.lt.s32.totalorder %s16, 9
      %p155 = pnand %p153, %p154
      %p156 = pneg %p155
      // Predicated region
      $region9: #{tpu_custom_call.1} parent=5 // pred_check
        _
      $region10: #{tpu_custom_call.1} parent=5 // pred_check_branch
        %158 = sbr.rel (%p155) target = $region12
      $region11: #{tpu_custom_call.1} parent=5 // pred_region
        %s159 = ssub.s32 %s16, 1
        // Predicated region
        $region13: #{tpu_custom_call.1} parent=11 // pred_check
          %p160 = pneg %p89
        $region14: #{tpu_custom_call.1} parent=11 // pred_check_branch
          %162 = sbr.rel (%p160) target = $region16
        $region15: #{tpu_custom_call.1} parent=11 // pred_region
          %s164 = ssub.s32 256, 256
          %165 = vsyncadd [#allocation6], %s164
          %s166 = smul.addr %s27, 64
          %s167 = scalar_lea.hbm %s1, %s166
          %s168 = sshll.u32 [#allocation5], 4
          %s169 = int_to_ptr.vmem [resolvable:$true] %s168
          %174 = dma.hbm_to_vmem [thread:$0]  %s167, 256, %s169, [#allocation6], 64, 64, 4
        $region16: #{tpu_custom_call.1} parent=11 // pred_fallthru
          _
        // Predicated region
        $region17: #{tpu_custom_call.1} parent=11 // pred_check
          %p175 = pneg %p115
        $region18: #{tpu_custom_call.1} parent=11 // pred_check_branch
          %177 = sbr.rel (%p175) target = $region20
        $region19: #{tpu_custom_call.1} parent=11 // pred_region
          %p178 = scmp.lt.s32.totalorder %s27, 0
          %s179 = scalar_select %p178, %s27, 0
          %s180 = scalar_lea.vmem %s2, %s179
        $region20: #{tpu_custom_call.1} parent=11 // pred_fallthru
          _
      $region12: #{tpu_custom_call.1} parent=5 // pred_fallthru
        _
      %p181 = scmp.lt.s32.totalorder %s16, 8
      // Predicated region
      $region21: #{tpu_custom_call.1} parent=5 // pred_check
        %p182 = pneg %p181
      $region22: #{tpu_custom_call.1} parent=5 // pred_check_branch
        %184 = sbr.rel (%p182) target = $region24
      $region23: #{tpu_custom_call.1} parent=5 // pred_region
        // Predicated region
        $region25: #{tpu_custom_call.1} parent=23 // pred_check
          %p185 = pneg %p57
        $region26: #{tpu_custom_call.1} parent=23 // pred_check_branch
          %187 = sbr.rel (%p185) target = $region28
        $region27: #{tpu_custom_call.1} parent=23 // pred_region
          %s188 = sand.u32 %s47, 1
          %s189 = scalar_lea.sflag [#allocation3], %s188
          %s190 = sand.u32 %s47, 1
          %s191 = smul.addr %s190, 64
          %s192 = scalar_lea.vmem [#allocation2], %s191
          %s193 = smul.u32 8, %s25
          %s195 = ssub.s32 1024, 1024
          %196 = vsyncadd %s189, %s195
          %s197 = smul.addr %s193, 2
          %s198 = smul.addr %s23, 32
          %s199 = sadd.s32 %s197, %s198
          %s200 = smul.addr %s199, 64
          %s201 = scalar_lea.hbm %s0, %s200
          %s202 = sshll.u32 %s192, 4
          %s203 = int_to_ptr.vmem [resolvable:$true] %s202
          %208 = dma.hbm_to_vmem [thread:$0]  %s201, 1024, %s203, %s189, 64, 64, 4
        $region28: #{tpu_custom_call.1} parent=23 // pred_fallthru
          _
      $region24: #{tpu_custom_call.1} parent=5 // pred_fallthru
        _
      %p209 = scmp.le.s32.totalorder 1, %s16
      %p210 = scmp.lt.s32.totalorder %s16, 9
      %p211 = pnand %p209, %p210
      %p212 = pneg %p211
      // Predicated region
      $region29: #{tpu_custom_call.1} parent=5 // pred_check
        _
      $region30: #{tpu_custom_call.1} parent=5 // pred_check_branch
        %214 = sbr.rel (%p211) target = $region32
      $region31: #{tpu_custom_call.1} parent=5 // pred_region
        %s215 = ssub.s32 %s16, 1
        %s216 = sand.u32 %s50, 1
        %s217 = scalar_lea.sflag [#allocation3], %s216
        %s218 = sand.u32 %s50, 1
        %s219 = smul.addr %s218, 64
        %s220 = scalar_lea.vmem [#allocation2], %s219
        // Predicated region
        $region33: #{tpu_custom_call.1} parent=31 // pred_check
          %p221 = pneg %p63
        $region34: #{tpu_custom_call.1} parent=31 // pred_check_branch
          %223 = sbr.rel (%p221) target = $region36
        $region35: #{tpu_custom_call.1} parent=31 // pred_region
          %224 = dma.done %s217, 1024
        $region36: #{tpu_custom_call.1} parent=31 // pred_fallthru
          _
        // Predicated region
        $region37: #{tpu_custom_call.1} parent=31 // pred_check
          %p225 = pneg %p89
        $region38: #{tpu_custom_call.1} parent=31 // pred_check_branch
          %227 = sbr.rel (%p225) target = $region40
        $region39: #{tpu_custom_call.1} parent=31 // pred_region
          %228 = dma.done [#allocation6], 256
        $region40: #{tpu_custom_call.1} parent=31 // pred_fallthru
          _
        %s229 = sand.u32 %s50, 1
        %s230 = scalar_lea.sflag [#allocation3], %s229
        %s231 = sand.u32 %s50, 1
        %s232 = smul.addr %s231, 64
        %s233 = scalar_lea.vmem [#allocation2], %s232
        %p234 = pneg %p63
        %p235 = pneg %p60
        %p236 = pneg %p89
        %p237 = pneg %p86
        %p238 = scmp.lt.s32.totalorder %s27, 0
        %s239 = scalar_select %p238, %s27, 0
        %s240 = scalar_lea.vmem %s2, %s239
        %p241 = pneg %p115
        %p242 = pneg %p112
        %p243 = pneg %p145
        %p244 = pneg %p142
        %s245 = sand.u32 %s132, 1
        %s246 = scalar_lea.sflag [#allocation4], %s245
        %s247 = sand.u32 %s132, 1
        %s248 = smul.addr %s247, 64
        %s249 = scalar_lea.vmem [#allocation7], %s248
        %s250 = smul.u32 8, %s28
        %p251 = scmp.lt.s32.totalorder %s27, 0
        %s252 = scalar_select %p251, %s27, 0
        %s253 = scalar_lea.vmem %s2, %s252
        %s254 = smul.u32 8, %s28
        %v256 = vld [vmem:[%s220] sm:$0xf]
        %v257 = vld [vmem:[%s220 + $0x4] sm:$0xf]
        %v258 = vld [vmem:[%s220 + $0x8] sm:$0xf]
        %v259 = vld [vmem:[%s220 + $0xc] sm:$0xf]
        %v260 = vld [vmem:[%s220 + $0x10] sm:$0xf]
        %v261 = vld [vmem:[%s220 + $0x14] sm:$0xf]
        %v262 = vld [vmem:[%s220 + $0x18] sm:$0xf]
        %v263 = vld [vmem:[%s220 + $0x1c] sm:$0xf]
        %v264 = vld [vmem:[%s220 + $0x20] sm:$0xf]
        %v265 = vld [vmem:[%s220 + $0x24] sm:$0xf]
        %v266 = vld [vmem:[%s220 + $0x28] sm:$0xf]
        %v267 = vld [vmem:[%s220 + $0x2c] sm:$0xf]
        %v268 = vld [vmem:[%s220 + $0x30] sm:$0xf]
        %v269 = vld [vmem:[%s220 + $0x34] sm:$0xf]
        %v270 = vld [vmem:[%s220 + $0x38] sm:$0xf]
        %v271 = vld [vmem:[%s220 + $0x3c] sm:$0xf]
        %v272 = vld [vmem:[#allocation5] sm:$0xf]
        %v273 = vld [vmem:[#allocation5 + $0x4] sm:$0xf]
        %v274 = vld [vmem:[#allocation5 + $0x8] sm:$0xf]
        %v275 = vld [vmem:[#allocation5 + $0xc] sm:$0x3]
        %v276 = vld [vmem:[%s253] sm:$0x1]
        %v278 = vlaneseq
        %v279 = vshrl.u32 %v278, 7
        %v280 = vsub.s32 0, %v279
        %v281 = vrot.slane %v276, %v280
        %v299 = vunpack.c.l.b16 %v256
        %v300 = vunpack.c.l.b16 %v257
        %v301 = vunpack.c.l.b16 %v258
        %v302 = vunpack.c.l.b16 %v259
        %v303 = vunpack.c.l.b16 %v260
        %v304 = vunpack.c.l.b16 %v261
        %v305 = vunpack.c.l.b16 %v262
        %v306 = vunpack.c.l.b16 %v263
        %v307 = vunpack.c.l.b16 %v264
        %v308 = vunpack.c.l.b16 %v265
        %v309 = vunpack.c.l.b16 %v266
        %v310 = vunpack.c.l.b16 %v267
        %v311 = vunpack.c.l.b16 %v268
        %v312 = vunpack.c.l.b16 %v269
        %v313 = vunpack.c.l.b16 %v270
        %v314 = vunpack.c.l.b16 %v271
        %v315 = vpack.c.b16 %v300, %v299
        %v316 = vpack.c.b16 %v302, %v301
        %v317 = vpack.c.b16 %v304, %v303
        %v318 = vpack.c.b16 %v306, %v305
        %v319 = vpack.c.b16 %v308, %v307
        %v320 = vpack.c.b16 %v310, %v309
        %v321 = vpack.c.b16 %v312, %v311
        %v322 = vpack.c.b16 %v314, %v313
        %v327 = vunpack.c.l.b16 %v272
        %v328 = vunpack.c.l.b16 %v273
        %v329 = vunpack.c.l.b16 %v274
        %v330 = vunpack.c.l.b16 %v275
        %v331 = vpack.c.b16 %v328, %v327
        %v332 = vpack.c.b16 %v330, %v329
        %vm334 = vcmask 220160
        %v336 = vsel %vm334, %v315, 0
        %v339 = vsel %vm334, %v316, 0
        %v342 = vsel %vm334, %v317, 0
        %v345 = vsel %vm334, %v318, 0
        %v348 = vsel %vm334, %v319, 0
        %v351 = vsel %vm334, %v320, 0
        %v354 = vsel %vm334, %v321, 0
        %v357 = vsel %vm334, %v322, 0
        %vm359 = vcmask 1044480
        %vm360 = vcmask 1045504
        %v361 = vsel %vm359, 4294967295, 65535
        %v362 = vsel %vm360, %v361, 0
        %v364 = vand.u32 %v332, %v362
        %366 = vmatprep.subr.bf16.mxu0 0
        %367 = vmatpush1.bf16.msra.mxu0 %v331
        %368 = vmatprep.subr.bf16.mxu0 0
        %369 = vmatpush1.bf16.msra.mxu0 %v364
        %370 = vmatprep.subr.bf16.mxu0 0
        %371 = vmatpush1.bf16.msra.mxu0 0
        %372 = vmatprep.subr.bf16.mxu0 0
        %373 = vmatpush1.bf16.msra.mxu0 0
        %374 = vmatprep.subr.bf16.mxu0 0
        %375 = vmatpush1.bf16.msra.mxu0 0
        %376 = vmatprep.subr.bf16.mxu0 0
        %377 = vmatpush1.bf16.msra.mxu0 0
        %378 = vmatprep.subr.bf16.mxu0 0
        %379 = vmatpush1.bf16.msra.mxu0 0
        %380 = vmatprep.subr.bf16.mxu0 0
        %381 = vmatpush1.bf16.msra.mxu0 0
        %382 = vmatprep.subr.bf16.mxu0 0
        %383 = vmatpush1.bf16.msra.mxu0 0
        %384 = vmatprep.subr.bf16.mxu0 0
        %385 = vmatpush1.bf16.msra.mxu0 0
        %386 = vmatprep.subr.bf16.mxu0 0
        %387 = vmatpush1.bf16.msra.mxu0 0
        %388 = vmatprep.subr.bf16.mxu0 0
        %389 = vmatpush1.bf16.msra.mxu0 0
        %390 = vmatprep.subr.bf16.mxu0 0
        %391 = vmatpush1.bf16.msra.mxu0 0
        %392 = vmatprep.subr.bf16.mxu0 0
        %393 = vmatpush1.bf16.msra.mxu0 0
        %394 = vmatprep.subr.bf16.mxu0 0
        %395 = vmatpush1.bf16.msra.mxu0 0
        %396 = vmatprep.subr.bf16.mxu0 0
        %397 = vmatpush1.bf16.msra.mxu0 0
        %398 = vmatprep.mubr.bf16.mxu0 0
        %399 = vmatmul.mubr.bf16.gmra.mrb[0].mxu0 %v336
        %v400 = vpop.f32.mrb[0].mxu0
        %v401 = vadd.f32 %v281, %v400
        %v402 = vpop.f32.mrb[0].mxu0
        %v403 = vpop.f32.mrb[0].mxu0
        %v404 = vadd.f32 %v281, %v403
        %v405 = vpop.f32.mrb[0].mxu0
        %406 = vmatprep.mubr.bf16.mxu0 0
        %407 = vmatmul.mubr.bf16.gmra.mrb[0].mxu0 %v339
        %v408 = vpop.f32.mrb[0].mxu0
        %v409 = vadd.f32 %v281, %v408
        %v410 = vpop.f32.mrb[0].mxu0
        %v411 = vpop.f32.mrb[0].mxu0
        %v412 = vadd.f32 %v281, %v411
        %v413 = vpop.f32.mrb[0].mxu0
        %414 = vmatprep.mubr.bf16.mxu0 0
        %415 = vmatmul.mubr.bf16.gmra.mrb[0].mxu0 %v342
        %v416 = vpop.f32.mrb[0].mxu0
        %v417 = vadd.f32 %v281, %v416
        %v418 = vpop.f32.mrb[0].mxu0
        %v419 = vpop.f32.mrb[0].mxu0
        %v420 = vadd.f32 %v281, %v419
        %v421 = vpop.f32.mrb[0].mxu0
        %422 = vmatprep.mubr.bf16.mxu0 0
        %423 = vmatmul.mubr.bf16.gmra.mrb[0].mxu0 %v345
        %v424 = vpop.f32.mrb[0].mxu0
        %v425 = vadd.f32 %v281, %v424
        %v426 = vpop.f32.mrb[0].mxu0
        %v427 = vpop.f32.mrb[0].mxu0
        %v428 = vadd.f32 %v281, %v427
        %v429 = vpop.f32.mrb[0].mxu0
        %430 = vmatprep.mubr.bf16.mxu0 0
        %431 = vmatmul.mubr.bf16.gmra.mrb[0].mxu0 %v348
        %v432 = vpop.f32.mrb[0].mxu0
        %v433 = vadd.f32 %v281, %v432
        %v434 = vpop.f32.mrb[0].mxu0
        %v435 = vpop.f32.mrb[0].mxu0
        %v436 = vadd.f32 %v281, %v435
        %v437 = vpop.f32.mrb[0].mxu0
        %438 = vmatprep.mubr.bf16.mxu0 0
        %439 = vmatmul.mubr.bf16.gmra.mrb[0].mxu0 %v351
        %v440 = vpop.f32.mrb[0].mxu0
        %v441 = vadd.f32 %v281, %v440
        %v442 = vpop.f32.mrb[0].mxu0
        %v443 = vpop.f32.mrb[0].mxu0
        %v444 = vadd.f32 %v281, %v443
        %v445 = vpop.f32.mrb[0].mxu0
        %446 = vmatprep.mubr.bf16.mxu0 0
        %447 = vmatmul.mubr.bf16.gmra.mrb[0].mxu0 %v354
        %v448 = vpop.f32.mrb[0].mxu0
        %v449 = vadd.f32 %v281, %v448
        %v450 = vpop.f32.mrb[0].mxu0
        %v451 = vpop.f32.mrb[0].mxu0
        %v452 = vadd.f32 %v281, %v451
        %v453 = vpop.f32.mrb[0].mxu0
        %454 = vmatprep.mubr.bf16.mxu0 0
        %455 = vmatmul.mubr.bf16.gmra.mrb[0].mxu0 %v357
        %v456 = vpop.f32.mrb[0].mxu0
        %v457 = vadd.f32 %v281, %v456
        %v458 = vpop.f32.mrb[0].mxu0
        %v459 = vpop.f32.mrb[0].mxu0
        %v460 = vadd.f32 %v281, %v459
        %v461 = vpop.f32.mrb[0].mxu0
        %462 = vdwg.mxu0
        %v463 = vmax.f32 %v401, 0.0
        %v464 = vmax.f32 %v404, 0.0
        %v465 = vmax.f32 %v409, 0.0
        %v466 = vmax.f32 %v412, 0.0
        %v467 = vmax.f32 %v417, 0.0
        %v468 = vmax.f32 %v420, 0.0
        %v469 = vmax.f32 %v425, 0.0
        %v470 = vmax.f32 %v428, 0.0
        %v471 = vmax.f32 %v433, 0.0
        %v472 = vmax.f32 %v436, 0.0
        %v473 = vmax.f32 %v441, 0.0
        %v474 = vmax.f32 %v444, 0.0
        %v475 = vmax.f32 %v449, 0.0
        %v476 = vmax.f32 %v452, 0.0
        %v477 = vmax.f32 %v457, 0.0
        %v478 = vmax.f32 %v460, 0.0
        %v479 = vpack.c.bf16 %v464, %v463
        %v480 = vpack.c.bf16 %v466, %v465
        %v481 = vpack.c.bf16 %v468, %v467
        %v482 = vpack.c.bf16 %v470, %v469
        %v483 = vpack.c.bf16 %v472, %v471
        %v484 = vpack.c.bf16 %v474, %v473
        %v485 = vpack.c.bf16 %v476, %v475
        %v486 = vpack.c.bf16 %v478, %v477
        %v495 = vunpack.c.l.b16 %v479
        %v496 = vunpack.c.h.b16 %v479
        %v497 = vunpack.c.l.b16 %v480
        %v498 = vunpack.c.h.b16 %v480
        %v499 = vunpack.c.l.b16 %v481
        %v500 = vunpack.c.h.b16 %v481
        %v501 = vunpack.c.l.b16 %v482
        %v502 = vunpack.c.h.b16 %v482
        %v503 = vunpack.c.l.b16 %v483
        %v504 = vunpack.c.h.b16 %v483
        %v505 = vunpack.c.l.b16 %v484
        %v506 = vunpack.c.h.b16 %v484
        %v507 = vunpack.c.l.b16 %v485
        %v508 = vunpack.c.h.b16 %v485
        %v509 = vunpack.c.l.b16 %v486
        %v510 = vunpack.c.h.b16 %v486
        %v511 = vpack.c.b16 %v495, %v495
        %v512 = vpack.c.b16 %v496, %v496
        %v513 = vpack.c.b16 %v497, %v497
        %v514 = vpack.c.b16 %v498, %v498
        %v515 = vpack.c.b16 %v499, %v499
        %v516 = vpack.c.b16 %v500, %v500
        %v517 = vpack.c.b16 %v501, %v501
        %v518 = vpack.c.b16 %v502, %v502
        %v519 = vpack.c.b16 %v503, %v503
        %v520 = vpack.c.b16 %v504, %v504
        %v521 = vpack.c.b16 %v505, %v505
        %v522 = vpack.c.b16 %v506, %v506
        %v523 = vpack.c.b16 %v507, %v507
        %v524 = vpack.c.b16 %v508, %v508
        %v525 = vpack.c.b16 %v509, %v509
        %v526 = vpack.c.b16 %v510, %v510
        %vm543 = vcmask 519168
        %544 = vst.msk [vmem:[%s249] sm:$0xf] %vm543, %v511
        %545 = vst.msk [vmem:[%s249 + $0x4] sm:$0xf] %vm543, %v512
        %546 = vst.msk [vmem:[%s249 + $0x8] sm:$0xf] %vm543, %v513
        %547 = vst.msk [vmem:[%s249 + $0xc] sm:$0xf] %vm543, %v514
        %548 = vst.msk [vmem:[%s249 + $0x10] sm:$0xf] %vm543, %v515
        %549 = vst.msk [vmem:[%s249 + $0x14] sm:$0xf] %vm543, %v516
        %550 = vst.msk [vmem:[%s249 + $0x18] sm:$0xf] %vm543, %v517
        %551 = vst.msk [vmem:[%s249 + $0x1c] sm:$0xf] %vm543, %v518
        %552 = vst.msk [vmem:[%s249 + $0x20] sm:$0xf] %vm543, %v519
        %553 = vst.msk [vmem:[%s249 + $0x24] sm:$0xf] %vm543, %v520
        %554 = vst.msk [vmem:[%s249 + $0x28] sm:$0xf] %vm543, %v521
        %555 = vst.msk [vmem:[%s249 + $0x2c] sm:$0xf] %vm543, %v522
        %556 = vst.msk [vmem:[%s249 + $0x30] sm:$0xf] %vm543, %v523
        %557 = vst.msk [vmem:[%s249 + $0x34] sm:$0xf] %vm543, %v524
        %558 = vst.msk [vmem:[%s249 + $0x38] sm:$0xf] %vm543, %v525
        %559 = vst.msk [vmem:[%s249 + $0x3c] sm:$0xf] %vm543, %v526
        %s560 = sand.u32 %s132, 1
        %s561 = scalar_lea.sflag [#allocation4], %s560
        %s562 = sand.u32 %s132, 1
        %s563 = smul.addr %s562, 64
        %s564 = scalar_lea.vmem [#allocation7], %s563
        // Predicated region
        $region41: #{tpu_custom_call.1} parent=31 // pred_check
          %p565 = pneg %p142
        $region42: #{tpu_custom_call.1} parent=31 // pred_check_branch
          %567 = sbr.rel (%p565) target = $region44
        $region43: #{tpu_custom_call.1} parent=31 // pred_region
          %s568 = smul.u32 8, %s28
          %s570 = ssub.s32 1024, 1024
          %571 = vsyncadd %s561, %s570
          %s572 = smul.addr %s568, 2
          %s573 = sadd.s32 %s27, %s572
          %s574 = smul.addr %s26, 32
          %s575 = sadd.s32 %s573, %s574
          %s576 = smul.addr %s575, 64
          %s577 = scalar_lea.hbm %s3, %s576
          %s578 = sshll.u32 %s564, 4
          %s579 = int_to_ptr.vmem [resolvable:$true] %s578
          %584 = dma.vmem_to_hbm [thread:$0]  %s579, 1024, %s577, %s561, 64, 64, 4
        $region44: #{tpu_custom_call.1} parent=31 // pred_fallthru
          _
      $region32: #{tpu_custom_call.1} parent=5 // pred_fallthru
        _
      %p585 = scmp.le.s32.totalorder 2, %s16
      // Predicated region
      $region45: #{tpu_custom_call.1} parent=5 // pred_check
        %p586 = pneg %p585
      $region46: #{tpu_custom_call.1} parent=5 // pred_check_branch
        %588 = sbr.rel (%p586) target = $region48
      $region47: #{tpu_custom_call.1} parent=5 // pred_region
        %s589 = ssub.s32 %s16, 2
        // Predicated region
        $region49: #{tpu_custom_call.1} parent=47 // pred_check
          %p590 = pneg %p148
        $region50: #{tpu_custom_call.1} parent=47 // pred_check_branch
          %592 = sbr.rel (%p590) target = $region52
        $region51: #{tpu_custom_call.1} parent=47 // pred_region
          %s593 = sand.u32 %s133, 1
          %s594 = scalar_lea.sflag [#allocation4], %s593
          %s595 = sand.u32 %s133, 1
          %s596 = smul.addr %s595, 64
          %s597 = scalar_lea.vmem [#allocation7], %s596
          %598 = dma.done %s594, 1024
        $region52: #{tpu_custom_call.1} parent=47 // pred_fallthru
          _
      $region48: #{tpu_custom_call.1} parent=5 // pred_fallthru
        _
    $region6: #{tpu_custom_call.1} parent=1 // loop_footer
      %s20 = sadd.s32 1, %s16
    $region7: #{tpu_custom_call.1} parent=1 // loop_footer_branch
      %15 = sbr.rel target = $region3
    $region8: #{tpu_custom_call.1} parent=1 // loop_exit
      _
    %599 = vsyncpa [#allocation3], 1
    %s600 = scalar_lea.sflag [#allocation3], 1
    %601 = vsyncpa %s600, 1
    %602 = vsyncpa [#allocation6], 1
    %603 = vsyncpa [#allocation4], 1
    %s604 = scalar_lea.sflag [#allocation4], 1
    %605 = vsyncpa %s604, 1

</llo_original>
